<compile_context>
chip_gen: v6e
topology: v6e:2x2x1
jax: 0.10.0
libtpu: 0.0.40
codegen_flags: <defaults>
</compile_context>

<pallas_src>
import jax
import jax.numpy as jnp
from jax import lax
from jax.experimental import pallas as pl
from jax.experimental.pallas import tpu as pltpu


def _round_up(x, m):
    return (x + m - 1) // m * m


def _uvych_kernel(x_ref, w1_ref, b1_ref, g_ref, beta_ref,
                  w2_ref, b2_ref, w3_ref, b3_ref, o_ref):
    # Load the small (1, features) parameter rows once per grid step.
    b1 = b1_ref[...]
    gamma = g_ref[...]
    beta = beta_ref[...]
    b2 = b2_ref[...]
    b3 = b3_ref[...]

    x = x_ref[...]                                     # (TM, orig_size) bf16

    # ft[0]: Linear(orig_size -> hidden).  bf16 operands, f32 accumulation (MXU).
    h = jnp.dot(x, w1_ref[...], preferred_element_type=jnp.float32) + b1

    # ft[1]: LayerNorm(hidden), eps=1e-5 — single-pass mean/variance.
    inv_n = 1.0 / h.shape[-1]
    s1 = jnp.sum(h, axis=-1, keepdims=True)
    s2 = jnp.sum(h * h, axis=-1, keepdims=True)
    mu = s1 * inv_n
    var = jnp.maximum(s2 * inv_n - mu * mu, 0.0)
    h = (h - mu) * lax.rsqrt(var + 1e-5)
    h = h * gamma + beta

    # ft[2]: LeakyReLU (negative_slope = 0.01, PyTorch default).
    h = jnp.where(h >= 0.0, h, 0.01 * h)

    # ft[3]: Linear(hidden -> hidden).
    h = jnp.dot(h.astype(w2_ref.dtype), w2_ref[...],
                preferred_element_type=jnp.float32) + b2

    # ft[4]: Sigmoid.  exp on the EUP; approx reciprocal also on the EUP.
    # Clamp keeps exp(-h) finite for very negative h (approx recip of inf -> NaN).
    h = jnp.maximum(h, -60.0)
    h = pl.reciprocal(1.0 + jnp.exp(-h), approx=True)

    # inv: Linear(hidden -> orig_size).
    y = jnp.dot(h.astype(w3_ref.dtype), w3_ref[...],
                preferred_element_type=jnp.float32) + b3

    o_ref[...] = y.astype(o_ref.dtype)


def uvych_dim_expand(x, params, *, batch_tile=128, matmul_dtype=jnp.bfloat16):
    """x: (batch, height, width) float32.  Returns the same shape/dtype."""
    orig_shape = x.shape
    bs = x.shape[0]
    orig_size = x.shape[1] * x.shape[2]

    w1, b1, gamma, beta, w2, b2, w3, b3 = params
    hidden = w1.shape[1]

    # Matmul operands in bf16 (MXU-native; halves HBM bytes for x / weights).
    x2d = x.reshape(bs, orig_size).astype(matmul_dtype)
    w1c = w1.astype(matmul_dtype)
    w2c = w2.astype(matmul_dtype)
    w3c = w3.astype(matmul_dtype)

    # Batch grid: pad M up to a multiple of the batch tile (>= 8 sublanes).
    tm = min(batch_tile, _round_up(bs, 8))
    padded_bs = _round_up(bs, tm)
    if padded_bs != bs:
        x2d = jnp.pad(x2d, ((0, padded_bs - bs), (0, 0)))
    grid = (padded_bs // tm,)

    act_in_spec = pl.BlockSpec((tm, orig_size), lambda i: (i, 0))
    act_out_spec = pl.BlockSpec((tm, orig_size), lambda i: (i, 0))

    def resident(shape):
        # Constant index_map -> operand stays VMEM-resident across grid steps.
        return pl.BlockSpec(shape, lambda i: (0, 0))

    in_specs = [
        act_in_spec,                       # x tile
        resident((orig_size, hidden)),     # w1
        resident((1, hidden)),             # b1
        resident((1, hidden)),             # gamma
        resident((1, hidden)),             # beta
        resident((hidden, hidden)),        # w2
        resident((1, hidden)),             # b2
        resident((hidden, orig_size)),     # w3
        resident((1, orig_size)),          # b3
    ]

    itemsize = jnp.dtype(matmul_dtype).itemsize
    weight_bytes = (orig_size * hidden + hidden * hidden + hidden * orig_size) * itemsize
    bias_bytes = (4 * hidden + orig_size) * 4
    io_bytes = padded_bs * orig_size * (itemsize + 4)
    cost = pl.CostEstimate(
        flops=2 * padded_bs * hidden * (2 * orig_size + hidden),
        transcendentals=2 * padded_bs * hidden,   # exp + approx reciprocal
        bytes_accessed=weight_bytes + bias_bytes + io_bytes,
    )

    # VMEM budget: resident weights + double-buffered activation tiles + slack.
    vmem_need = (weight_bytes + bias_bytes
                 + 2 * tm * orig_size * itemsize        # x tiles (double-buffered)
                 + 2 * tm * orig_size * 4               # out tiles (double-buffered)
                 + 4 * tm * max(orig_size, hidden) * 4)  # intermediate headroom
    vmem_limit = int(min(48 * 2**20, max(32 * 2**20, 2 * vmem_need)))

    out = pl.pallas_call(
        _uvych_kernel,
        out_shape=jax.ShapeDtypeStruct((padded_bs, orig_size), jnp.float32),
        grid_spec=pltpu.PrefetchScalarGridSpec(
            num_scalar_prefetch=0,
            grid=grid,
            in_specs=in_specs,
            out_specs=act_out_spec,
        ),
        compiler_params=pltpu.CompilerParams(
            dimension_semantics=("parallel",),
            vmem_limit_bytes=vmem_limit,
        ),
        cost_estimate=cost,
    )(x2d, w1c, b1, gamma, beta, w2c, b2, w3c, b3)

    return out[:bs].astype(x.dtype).reshape(orig_shape)


def init_params(width, height, hidden_size, key):
    """Deterministic synthetic parameter init (shapes match the PyTorch module).

    Weights are stored transposed relative to nn.Linear: (in_features, out_features).
    """
    orig_size = width * height
    k1, k2, k3 = jax.random.split(key, 3)
    s1 = 1.0 / jnp.sqrt(jnp.float32(orig_size))
    s2 = 1.0 / jnp.sqrt(jnp.float32(hidden_size))

    w1 = jax.random.uniform(k1, (orig_size, hidden_size), jnp.float32, -s1, s1)
    b1 = jnp.zeros((1, hidden_size), jnp.float32)
    gamma = jnp.ones((1, hidden_size), jnp.float32)
    beta = jnp.zeros((1, hidden_size), jnp.float32)
    w2 = jax.random.uniform(k2, (hidden_size, hidden_size), jnp.float32, -s2, s2)
    b2 = jnp.full((1, hidden_size), 0.01, jnp.float32)
    w3 = jax.random.uniform(k3, (hidden_size, orig_size), jnp.float32, -s2, s2)
    b3 = jnp.full((1, orig_size), -0.01, jnp.float32)
    return (w1, b1, gamma, beta, w2, b2, w3, b3)


def _reference_f32(x, params):
    """Pure-JAX f32 reference (mirrors the PyTorch module exactly)."""
    w1, b1, gamma, beta, w2, b2, w3, b3 = params
    bs = x.shape[0]
    h = x.reshape(bs, -1) @ w1 + b1
    mu = jnp.mean(h, axis=-1, keepdims=True)
    var = jnp.mean((h - mu) ** 2, axis=-1, keepdims=True)
    h = (h - mu) / jnp.sqrt(var + 1e-5) * gamma + beta
    h = jnp.where(h >= 0, h, 0.01 * h)
    h = jax.nn.sigmoid(h @ w2 + b2)
    y = h @ w3 + b3
    return y.reshape(x.shape)


def _reference_matched(x, params, matmul_dtype=jnp.bfloat16):
    """Reference mirroring the kernel's bf16 matmul-operand casting."""
    w1, b1, gamma, beta, w2, b2, w3, b3 = params
    bs = x.shape[0]
    xd = x.reshape(bs, -1).astype(matmul_dtype)
    h = jnp.dot(xd, w1.astype(matmul_dtype), preferred_element_type=jnp.float32) + b1
    mu = jnp.mean(h, axis=-1, keepdims=True)
    var = jnp.mean((h - mu) ** 2, axis=-1, keepdims=True)
    h = (h - mu) / jnp.sqrt(var + 1e-5) * gamma + beta
    h = jnp.where(h >= 0, h, 0.01 * h)
    h = jnp.dot(h.astype(matmul_dtype), w2.astype(matmul_dtype),
                preferred_element_type=jnp.float32) + b2
    h = jax.nn.sigmoid(h)
    y = jnp.dot(h.astype(matmul_dtype), w3.astype(matmul_dtype),
                preferred_element_type=jnp.float32) + b3
    return y.reshape(x.shape)


if __name__ == "__main__":
    width, height, hidden_size = 16, 16, 32
    batch = 2

    key = jax.random.PRNGKey(0)
    kx, kp = jax.random.split(key)
    x = jax.random.normal(kx, (batch, height, width), jnp.float32)
    params = init_params(width, height, hidden_size, kp)

    y = jax.block_until_ready(uvych_dim_expand(x, params))
    assert y.shape == x.shape and y.dtype == x.dtype

    y_matched = _reference_matched(x, params)
    assert jnp.allclose(y, y_matched, atol=1e-2, rtol=1e-2), \
        "mismatch vs bf16-matched reference"

    y_f32 = _reference_f32(x, params)
    assert jnp.allclose(y, y_f32, atol=3e-2, rtol=3e-2), \
        "mismatch vs full-f32 reference"

    print("KERNEL_OK")
</pallas_src>

<mosaic_0001>
module attributes {stable_mosaic.version = 11 : i64} {
  func.func @_uvych_kernel(%arg0: i32, %arg1: memref<8x256xbf16, #tpu.memory_space<vmem>>, %arg2: memref<256x32xbf16, #tpu.memory_space<vmem>>, %arg3: memref<1x32xf32, #tpu.memory_space<vmem>>, %arg4: memref<1x32xf32, #tpu.memory_space<vmem>>, %arg5: memref<1x32xf32, #tpu.memory_space<vmem>>, %arg6: memref<32x32xbf16, #tpu.memory_space<vmem>>, %arg7: memref<1x32xf32, #tpu.memory_space<vmem>>, %arg8: memref<32x256xbf16, #tpu.memory_space<vmem>>, %arg9: memref<1x256xf32, #tpu.memory_space<vmem>>, %arg10: memref<8x256xf32, #tpu.memory_space<vmem>>) attributes {dimension_semantics = [#tpu.dimension_semantics<parallel>], iteration_bounds = array<i64: 1>, scalar_prefetch = 0 : i64, scratch_operands = 0 : i64, tpu.core_type = #tpu.core_type<tc>, window_params = [{transform_indices = @transform_0, window_bounds = array<i64: 8, 256>}, {pipeline_mode = #tpu.pipeline_mode<synchronous>, transform_indices = @transform_1, window_bounds = array<i64: 256, 32>}, {pipeline_mode = #tpu.pipeline_mode<synchronous>, transform_indices = @transform_2, window_bounds = array<i64: 1, 32>}, {pipeline_mode = #tpu.pipeline_mode<synchronous>, transform_indices = @transform_3, window_bounds = array<i64: 1, 32>}, {pipeline_mode = #tpu.pipeline_mode<synchronous>, transform_indices = @transform_4, window_bounds = array<i64: 1, 32>}, {pipeline_mode = #tpu.pipeline_mode<synchronous>, transform_indices = @transform_5, window_bounds = array<i64: 32, 32>}, {pipeline_mode = #tpu.pipeline_mode<synchronous>, transform_indices = @transform_6, window_bounds = array<i64: 1, 32>}, {pipeline_mode = #tpu.pipeline_mode<synchronous>, transform_indices = @transform_7, window_bounds = array<i64: 32, 256>}, {pipeline_mode = #tpu.pipeline_mode<synchronous>, transform_indices = @transform_8, window_bounds = array<i64: 1, 256>}, {transform_indices = @transform_9, window_bounds = array<i64: 8, 256>}]} {
    %c0 = arith.constant 0 : index
    %c0_0 = arith.constant 0 : index
    %0 = vector.load %arg3[%c0, %c0_0] : memref<1x32xf32, #tpu.memory_space<vmem>>, vector<1x32xf32>
    %c0_1 = arith.constant 0 : index
    %c0_2 = arith.constant 0 : index
    %1 = vector.load %arg4[%c0_1, %c0_2] : memref<1x32xf32, #tpu.memory_space<vmem>>, vector<1x32xf32>
    %c0_3 = arith.constant 0 : index
    %c0_4 = arith.constant 0 : index
    %2 = vector.load %arg5[%c0_3, %c0_4] : memref<1x32xf32, #tpu.memory_space<vmem>>, vector<1x32xf32>
    %c0_5 = arith.constant 0 : index
    %c0_6 = arith.constant 0 : index
    %3 = vector.load %arg7[%c0_5, %c0_6] : memref<1x32xf32, #tpu.memory_space<vmem>>, vector<1x32xf32>
    %c0_7 = arith.constant 0 : index
    %c0_8 = arith.constant 0 : index
    %4 = vector.load %arg9[%c0_7, %c0_8] : memref<1x256xf32, #tpu.memory_space<vmem>>, vector<1x256xf32>
    %c0_9 = arith.constant 0 : index
    %c0_10 = arith.constant 0 : index
    %5 = vector.load %arg1[%c0_9, %c0_10] : memref<8x256xbf16, #tpu.memory_space<vmem>>, vector<8x256xbf16>
    %c0_11 = arith.constant 0 : index
    %c0_12 = arith.constant 0 : index
    %6 = vector.load %arg2[%c0_11, %c0_12] : memref<256x32xbf16, #tpu.memory_space<vmem>>, vector<256x32xbf16>
    %cst = arith.constant dense<0.000000e+00> : vector<8x32xf32>
    %7 = tpu.matmul %5, %6, %cst {dimension_numbers = #tpu.dot_dimension_numbers<[1], [0], [0], [1], [0, 0, 1, 1], [], []>} : vector<8x256xbf16>, vector<256x32xbf16>, vector<8x32xf32> -> vector<8x32xf32>
    %8 = vector.broadcast %0 : vector<1x32xf32> to vector<8x32xf32>
    %9 = arith.addf %7, %8 : vector<8x32xf32>
    %cst_13 = arith.constant dense<0.000000e+00> : vector<8xf32>
    %10 = vector.multi_reduction <add>, %9, %cst_13 [1] : vector<8x32xf32> to vector<8xf32>
    %11 = vector.shape_cast %10 : vector<8xf32> to vector<8x1xf32>
    %12 = arith.mulf %9, %9 : vector<8x32xf32>
    %cst_14 = arith.constant dense<0.000000e+00> : vector<8xf32>
    %13 = vector.multi_reduction <add>, %12, %cst_14 [1] : vector<8x32xf32> to vector<8xf32>
    %14 = vector.shape_cast %13 : vector<8xf32> to vector<8x1xf32>
    %cst_15 = arith.constant 3.125000e-02 : f32
    %15 = vector.broadcast %cst_15 : f32 to vector<8x1xf32>
    %16 = arith.mulf %11, %15 : vector<8x1xf32>
    %cst_16 = arith.constant 3.125000e-02 : f32
    %17 = vector.broadcast %cst_16 : f32 to vector<8x1xf32>
    %18 = arith.mulf %14, %17 : vector<8x1xf32>
    %19 = arith.mulf %16, %16 : vector<8x1xf32>
    %20 = arith.subf %18, %19 : vector<8x1xf32>
    %cst_17 = arith.constant 0.000000e+00 : f32
    %21 = vector.broadcast %cst_17 : f32 to vector<8x1xf32>
    %22 = arith.maximumf %20, %21 : vector<8x1xf32>
    %23 = vector.broadcast %16 : vector<8x1xf32> to vector<8x32xf32>
    %24 = arith.subf %9, %23 : vector<8x32xf32>
    %cst_18 = arith.constant 9.99999974E-6 : f32
    %25 = vector.broadcast %cst_18 : f32 to vector<8x1xf32>
    %26 = arith.addf %22, %25 : vector<8x1xf32>
    %27 = math.rsqrt %26 : vector<8x1xf32>
    %28 = vector.broadcast %27 : vector<8x1xf32> to vector<8x32xf32>
    %29 = arith.mulf %24, %28 : vector<8x32xf32>
    %30 = vector.broadcast %1 : vector<1x32xf32> to vector<8x32xf32>
    %31 = arith.mulf %29, %30 : vector<8x32xf32>
    %32 = vector.broadcast %2 : vector<1x32xf32> to vector<8x32xf32>
    %33 = arith.addf %31, %32 : vector<8x32xf32>
    %cst_19 = arith.constant 0.000000e+00 : f32
    %34 = vector.broadcast %cst_19 : f32 to vector<8x32xf32>
    %35 = arith.cmpf oge, %33, %34 : vector<8x32xf32>
    %cst_20 = arith.constant 0.00999999977 : f32
    %36 = vector.broadcast %cst_20 : f32 to vector<8x32xf32>
    %37 = arith.mulf %36, %33 : vector<8x32xf32>
    %38 = arith.select %35, %33, %37 : vector<8x32xi1>, vector<8x32xf32>
    %39 = arith.truncf %38 : vector<8x32xf32> to vector<8x32xbf16>
    %c0_21 = arith.constant 0 : index
    %c0_22 = arith.constant 0 : index
    %40 = vector.load %arg6[%c0_21, %c0_22] : memref<32x32xbf16, #tpu.memory_space<vmem>>, vector<32x32xbf16>
    %cst_23 = arith.constant dense<0.000000e+00> : vector<8x32xf32>
    %41 = tpu.matmul %39, %40, %cst_23 {dimension_numbers = #tpu.dot_dimension_numbers<[1], [0], [0], [1], [0, 0, 1, 1], [], []>} : vector<8x32xbf16>, vector<32x32xbf16>, vector<8x32xf32> -> vector<8x32xf32>
    %42 = vector.broadcast %3 : vector<1x32xf32> to vector<8x32xf32>
    %43 = arith.addf %41, %42 : vector<8x32xf32>
    %cst_24 = arith.constant -6.000000e+01 : f32
    %44 = vector.broadcast %cst_24 : f32 to vector<8x32xf32>
    %45 = arith.maximumf %43, %44 : vector<8x32xf32>
    %cst_25 = arith.constant 0.000000e+00 : f32
    %46 = vector.broadcast %cst_25 : f32 to vector<8x32xf32>
    %47 = arith.subf %46, %45 : vector<8x32xf32>
    %48 = math.exp %47 : vector<8x32xf32>
    %cst_26 = arith.constant 1.000000e+00 : f32
    %49 = vector.broadcast %cst_26 : f32 to vector<8x32xf32>
    %50 = arith.addf %49, %48 : vector<8x32xf32>
    %51 = tpu.reciprocal %50 {approx = true} : vector<8x32xf32> -> vector<8x32xf32>
    %52 = arith.truncf %51 : vector<8x32xf32> to vector<8x32xbf16>
    %c0_27 = arith.constant 0 : index
    %c0_28 = arith.constant 0 : index
    %53 = vector.load %arg8[%c0_27, %c0_28] : memref<32x256xbf16, #tpu.memory_space<vmem>>, vector<32x256xbf16>
    %cst_29 = arith.constant dense<0.000000e+00> : vector<8x256xf32>
    %54 = tpu.matmul %52, %53, %cst_29 {dimension_numbers = #tpu.dot_dimension_numbers<[1], [0], [0], [1], [0, 0, 1, 1], [], []>} : vector<8x32xbf16>, vector<32x256xbf16>, vector<8x256xf32> -> vector<8x256xf32>
    %55 = vector.broadcast %4 : vector<1x256xf32> to vector<8x256xf32>
    %56 = arith.addf %54, %55 : vector<8x256xf32>
    %c0_30 = arith.constant 0 : index
    %c0_31 = arith.constant 0 : index
    %57 = vector.load %arg10[%c0_30, %c0_31] : memref<8x256xf32, #tpu.memory_space<vmem>>, vector<8x256xf32>
    tpu.vector_store %arg10[%c0_30, %c0_31], %56 {strides = array<i32>} : memref<8x256xf32, #tpu.memory_space<vmem>>, vector<8x256xf32>,
    return
  }
  func.func @transform_0(%arg0: i32) -> (i32, i32) {
    %c0_i32 = arith.constant 0 : i32
    %c0_i32_0 = arith.constant 0 : i32
    return %arg0, %c0_i32 : i32, i32
  }
  func.func @transform_1(%arg0: i32) -> (i32, i32) {
    %c0_i32 = arith.constant 0 : i32
    %c0_i32_0 = arith.constant 0 : i32
    %c0_i32_1 = arith.constant 0 : i32
    return %c0_i32, %c0_i32_0 : i32, i32
  }
  func.func @transform_2(%arg0: i32) -> (i32, i32) {
    %c0_i32 = arith.constant 0 : i32
    %c0_i32_0 = arith.constant 0 : i32
    %c0_i32_1 = arith.constant 0 : i32
    return %c0_i32, %c0_i32_0 : i32, i32
  }
  func.func @transform_3(%arg0: i32) -> (i32, i32) {
    %c0_i32 = arith.constant 0 : i32
    %c0_i32_0 = arith.constant 0 : i32
    %c0_i32_1 = arith.constant 0 : i32
    return %c0_i32, %c0_i32_0 : i32, i32
  }
  func.func @transform_4(%arg0: i32) -> (i32, i32) {
    %c0_i32 = arith.constant 0 : i32
    %c0_i32_0 = arith.constant 0 : i32
    %c0_i32_1 = arith.constant 0 : i32
    return %c0_i32, %c0_i32_0 : i32, i32
  }
  func.func @transform_5(%arg0: i32) -> (i32, i32) {
    %c0_i32 = arith.constant 0 : i32
    %c0_i32_0 = arith.constant 0 : i32
    %c0_i32_1 = arith.constant 0 : i32
    return %c0_i32, %c0_i32_0 : i32, i32
  }
  func.func @transform_6(%arg0: i32) -> (i32, i32) {
    %c0_i32 = arith.constant 0 : i32
    %c0_i32_0 = arith.constant 0 : i32
    %c0_i32_1 = arith.constant 0 : i32
    return %c0_i32, %c0_i32_0 : i32, i32
  }
  func.func @transform_7(%arg0: i32) -> (i32, i32) {
    %c0_i32 = arith.constant 0 : i32
    %c0_i32_0 = arith.constant 0 : i32
    %c0_i32_1 = arith.constant 0 : i32
    return %c0_i32, %c0_i32_0 : i32, i32
  }
  func.func @transform_8(%arg0: i32) -> (i32, i32) {
    %c0_i32 = arith.constant 0 : i32
    %c0_i32_0 = arith.constant 0 : i32
    %c0_i32_1 = arith.constant 0 : i32
    return %c0_i32, %c0_i32_0 : i32, i32
  }
  func.func @transform_9(%arg0: i32) -> (i32, i32) {
    %c0_i32 = arith.constant 0 : i32
    %c0_i32_0 = arith.constant 0 : i32
    return %arg0, %c0_i32 : i32, i32
  }
}

</mosaic_0001>

<llo_original>
// kernel: tpu_custom_call.1
$region0: #{tpu_custom_call.1}
  #allocation0 [shape = 'u32[]', space=smem, size = 0x4, offset = 0x4, fixed_abs, tag = 'smem constant byte address 0x4 - core index']
  #allocation1 [shape = 'u32[144,128]{1,0:T(1,128)}', space=vmem, size = 0x12000, scoped, tag = 'internal scratch']
  %s0 = inlined_call_operand.vmem [shape: bf16[8,256], index: 0, kind: input, shape index: {}]
  %s1 = inlined_call_operand.vmem [shape: bf16[256,32], index: 1, kind: input, shape index: {}]
  %s2 = inlined_call_operand.vmem [shape: f32[1,32], index: 2, kind: input, shape index: {}]
  %s3 = inlined_call_operand.vmem [shape: f32[1,32], index: 3, kind: input, shape index: {}]
  %s4 = inlined_call_operand.vmem [shape: f32[1,32], index: 4, kind: input, shape index: {}]
  %s5 = inlined_call_operand.vmem [shape: bf16[32,32], index: 5, kind: input, shape index: {}]
  %s6 = inlined_call_operand.vmem [shape: f32[1,32], index: 6, kind: input, shape index: {}]
  %s7 = inlined_call_operand.vmem [shape: bf16[32,256], index: 7, kind: input, shape index: {}]
  %s8 = inlined_call_operand.vmem [shape: f32[1,256], index: 8, kind: input, shape index: {}]
  %s9 = inlined_call_operand.hbm [shape: f32[8,256], index: 9, kind: output, shape index: {}]
  %s10 = sld [smem:[#allocation0]]
  $region46: #{tpu_custom_call.1} parent=0
    _
  %s12 = ssub.s32 1, %s10
  %s13 = scalar_select 0, %s12, %s10
  $region1: #{tpu_custom_call.1} parent=0
    #allocation2 [shape = 'u8[8192]{0}', space=vmem, size = 0x2000, scoped, tag = 'output window, operand 0, single buffered']
    #allocation3 [shape = 's32[1]{0}', space=sflag, size = 0x4, scoped, tag = 'scoped memory for tpu_custom_call.1']
    %14 = vsyncpa [#allocation3], 0
    // Predicated region
    $region2: #{tpu_custom_call.1} parent=1 // pred_check
      _
    $region3: #{tpu_custom_call.1} parent=1 // pred_check_branch
      %16 = sbr.rel (0) target = $region5
    $region4: #{tpu_custom_call.1} parent=1 // pred_region
      _
    $region5: #{tpu_custom_call.1} parent=1 // pred_fallthru
      _
    // Predicated region
    $region6: #{tpu_custom_call.1} parent=1 // pred_check
      _
    $region7: #{tpu_custom_call.1} parent=1 // pred_check_branch
      %18 = sbr.rel (0) target = $region9
    $region8: #{tpu_custom_call.1} parent=1 // pred_region
      _
    $region9: #{tpu_custom_call.1} parent=1 // pred_fallthru
      _
    // Predicated region
    $region10: #{tpu_custom_call.1} parent=1 // pred_check
      _
    $region11: #{tpu_custom_call.1} parent=1 // pred_check_branch
      %20 = sbr.rel (0) target = $region13
    $region12: #{tpu_custom_call.1} parent=1 // pred_region
      _
    $region13: #{tpu_custom_call.1} parent=1 // pred_fallthru
      _
    // Predicated region
    $region14: #{tpu_custom_call.1} parent=1 // pred_check
      _
    $region15: #{tpu_custom_call.1} parent=1 // pred_check_branch
      %22 = sbr.rel (0) target = $region17
    $region16: #{tpu_custom_call.1} parent=1 // pred_region
      _
    $region17: #{tpu_custom_call.1} parent=1 // pred_fallthru
      _
    // Predicated region
    $region18: #{tpu_custom_call.1} parent=1 // pred_check
      _
    $region19: #{tpu_custom_call.1} parent=1 // pred_check_branch
      %24 = sbr.rel (0) target = $region21
    $region20: #{tpu_custom_call.1} parent=1 // pred_region
      _
    $region21: #{tpu_custom_call.1} parent=1 // pred_fallthru
      _
    // Predicated region
    $region22: #{tpu_custom_call.1} parent=1 // pred_check
      _
    $region23: #{tpu_custom_call.1} parent=1 // pred_check_branch
      %26 = sbr.rel (0) target = $region25
    $region24: #{tpu_custom_call.1} parent=1 // pred_region
      _
    $region25: #{tpu_custom_call.1} parent=1 // pred_fallthru
      _
    // Predicated region
    $region26: #{tpu_custom_call.1} parent=1 // pred_check
      _
    $region27: #{tpu_custom_call.1} parent=1 // pred_check_branch
      %28 = sbr.rel (0) target = $region29
    $region28: #{tpu_custom_call.1} parent=1 // pred_region
      _
    $region29: #{tpu_custom_call.1} parent=1 // pred_fallthru
      _
    // Predicated region
    $region30: #{tpu_custom_call.1} parent=1 // pred_check
      _
    $region31: #{tpu_custom_call.1} parent=1 // pred_check_branch
      %30 = sbr.rel (0) target = $region33
    $region32: #{tpu_custom_call.1} parent=1 // pred_region
      _
    $region33: #{tpu_custom_call.1} parent=1 // pred_fallthru
      _
    // Predicated region
    $region34: #{tpu_custom_call.1} parent=1 // pred_check
      _
    $region35: #{tpu_custom_call.1} parent=1 // pred_check_branch
      %32 = sbr.rel (0) target = $region37
    $region36: #{tpu_custom_call.1} parent=1 // pred_region
      _
    $region37: #{tpu_custom_call.1} parent=1 // pred_fallthru
      _
    %v34 = vld [vmem:[%s2] sm:$0x1]
    %v35 = vld [vmem:[%s3] sm:$0x1]
    %v36 = vld [vmem:[%s4] sm:$0x1]
    %v37 = vld [vmem:[%s6] sm:$0x1]
    %v38 = vld [vmem:[%s8] sm:$0x3]
    %v39 = vld [vmem:[%s0] sm:$0xff]
    %v40 = vld [vmem:[%s1] sm:$0xf]
    %v41 = vld [vmem:[%s1 + $0x4] sm:$0xf]
    %v42 = vld [vmem:[%s1 + $0x8] sm:$0xf]
    %v43 = vld [vmem:[%s1 + $0xc] sm:$0xf]
    %v44 = vld [vmem:[%s1 + $0x10] sm:$0xf]
    %v45 = vld [vmem:[%s1 + $0x14] sm:$0xf]
    %v46 = vld [vmem:[%s1 + $0x18] sm:$0xf]
    %v47 = vld [vmem:[%s1 + $0x1c] sm:$0xf]
    %v48 = vld [vmem:[%s1 + $0x20] sm:$0xf]
    %v49 = vld [vmem:[%s1 + $0x24] sm:$0xf]
    %v50 = vld [vmem:[%s1 + $0x28] sm:$0xf]
    %v51 = vld [vmem:[%s1 + $0x2c] sm:$0xf]
    %v52 = vld [vmem:[%s1 + $0x30] sm:$0xf]
    %v53 = vld [vmem:[%s1 + $0x34] sm:$0xf]
    %v54 = vld [vmem:[%s1 + $0x38] sm:$0xf]
    %v55 = vld [vmem:[%s1 + $0x3c] sm:$0xf]
    %v56 = vld [vmem:[%s1 + $0x40] sm:$0xf]
    %v57 = vld [vmem:[%s1 + $0x44] sm:$0xf]
    %v58 = vld [vmem:[%s1 + $0x48] sm:$0xf]
    %v59 = vld [vmem:[%s1 + $0x4c] sm:$0xf]
    %v60 = vld [vmem:[%s1 + $0x50] sm:$0xf]
    %v61 = vld [vmem:[%s1 + $0x54] sm:$0xf]
    %v62 = vld [vmem:[%s1 + $0x58] sm:$0xf]
    %v63 = vld [vmem:[%s1 + $0x5c] sm:$0xf]
    %v64 = vld [vmem:[%s1 + $0x60] sm:$0xf]
    %v65 = vld [vmem:[%s1 + $0x64] sm:$0xf]
    %v66 = vld [vmem:[%s1 + $0x68] sm:$0xf]
    %v67 = vld [vmem:[%s1 + $0x6c] sm:$0xf]
    %v68 = vld [vmem:[%s1 + $0x70] sm:$0xf]
    %v69 = vld [vmem:[%s1 + $0x74] sm:$0xf]
    %v70 = vld [vmem:[%s1 + $0x78] sm:$0xf]
    %v71 = vld [vmem:[%s1 + $0x7c] sm:$0xf]
    %v73 = vlaneseq
    %v74 = vshrl.u32 %v73, 7
    %v75 = vsub.s32 0, %v74
    %v76 = vrot.slane %v34, %v75
    %v79 = vunpack.c.l.b16 %v39
    %v80 = vunpack.c.h.b16 %v39
    %v81 = vpack.c.b16 %v79, %v79
    %v82 = vpack.c.b16 %v80, %v80
    %v117 = vunpack.c.l.b16 %v40
    %v118 = vunpack.c.l.b16 %v41
    %v119 = vunpack.c.l.b16 %v42
    %v120 = vunpack.c.l.b16 %v43
    %v121 = vunpack.c.l.b16 %v44
    %v122 = vunpack.c.l.b16 %v45
    %v123 = vunpack.c.l.b16 %v46
    %v124 = vunpack.c.l.b16 %v47
    %v125 = vunpack.c.l.b16 %v48
    %v126 = vunpack.c.l.b16 %v49
    %v127 = vunpack.c.l.b16 %v50
    %v128 = vunpack.c.l.b16 %v51
    %v129 = vunpack.c.l.b16 %v52
    %v130 = vunpack.c.l.b16 %v53
    %v131 = vunpack.c.l.b16 %v54
    %v132 = vunpack.c.l.b16 %v55
    %v133 = vunpack.c.l.b16 %v56
    %v134 = vunpack.c.l.b16 %v57
    %v135 = vunpack.c.l.b16 %v58
    %v136 = vunpack.c.l.b16 %v59
    %v137 = vunpack.c.l.b16 %v60
    %v138 = vunpack.c.l.b16 %v61
    %v139 = vunpack.c.l.b16 %v62
    %v140 = vunpack.c.l.b16 %v63
    %v141 = vunpack.c.l.b16 %v64
    %v142 = vunpack.c.l.b16 %v65
    %v143 = vunpack.c.l.b16 %v66
    %v144 = vunpack.c.l.b16 %v67
    %v145 = vunpack.c.l.b16 %v68
    %v146 = vunpack.c.l.b16 %v69
    %v147 = vunpack.c.l.b16 %v70
    %v148 = vunpack.c.l.b16 %v71
    %v149 = vpack.c.b16 %v118, %v117
    %v150 = vpack.c.b16 %v120, %v119
    %v151 = vpack.c.b16 %v122, %v121
    %v152 = vpack.c.b16 %v124, %v123
    %v153 = vpack.c.b16 %v126, %v125
    %v154 = vpack.c.b16 %v128, %v127
    %v155 = vpack.c.b16 %v130, %v129
    %v156 = vpack.c.b16 %v132, %v131
    %v157 = vpack.c.b16 %v134, %v133
    %v158 = vpack.c.b16 %v136, %v135
    %v159 = vpack.c.b16 %v138, %v137
    %v160 = vpack.c.b16 %v140, %v139
    %v161 = vpack.c.b16 %v142, %v141
    %v162 = vpack.c.b16 %v144, %v143
    %v163 = vpack.c.b16 %v146, %v145
    %v164 = vpack.c.b16 %v148, %v147
    %181 = vmatprep.subr.bf16.mxu0 0
    %182 = vmatpush1.bf16.msra.mxu0 %v156
    %183 = vmatprep.subr.bf16.mxu0 0
    %184 = vmatpush1.bf16.msra.mxu0 %v155
    %185 = vmatprep.subr.bf16.mxu0 0
    %186 = vmatpush1.bf16.msra.mxu0 %v154
    %187 = vmatprep.subr.bf16.mxu0 0
    %188 = vmatpush1.bf16.msra.mxu0 %v153
    %189 = vmatprep.subr.bf16.mxu0 0
    %190 = vmatpush1.bf16.msra.mxu0 %v152
    %191 = vmatprep.subr.bf16.mxu0 0
    %192 = vmatpush1.bf16.msra.mxu0 %v151
    %193 = vmatprep.subr.bf16.mxu0 0
    %194 = vmatpush1.bf16.msra.mxu0 %v150
    %195 = vmatprep.subr.bf16.mxu0 0
    %196 = vmatpush1.bf16.msra.mxu0 %v149
    %197 = vmatprep.subr.bf16.mxu0 0
    %198 = vmatpush2.bf16.msra.mxu0 %v164
    %199 = vmatprep.subr.bf16.mxu0 0
    %200 = vmatpush2.bf16.msra.mxu0 %v163
    %201 = vmatprep.subr.bf16.mxu0 0
    %202 = vmatpush2.bf16.msra.mxu0 %v162
    %203 = vmatprep.subr.bf16.mxu0 0
    %204 = vmatpush2.bf16.msra.mxu0 %v161
    %205 = vmatprep.subr.bf16.mxu0 0
    %206 = vmatpush2.bf16.msra.mxu0 %v160
    %207 = vmatprep.subr.bf16.mxu0 0
    %208 = vmatpush2.bf16.msra.mxu0 %v159
    %209 = vmatprep.subr.bf16.mxu0 0
    %210 = vmatpush2.bf16.msra.mxu0 %v158
    %211 = vmatprep.subr.bf16.mxu0 0
    %212 = vmatpush2.bf16.msra.mxu0 %v157
    %213 = vmatprep.mubr.bf16.mxu0 %v82
    %214 = vmatmul.mubr.bf16.gmra.mxu0 %v81
    %v215 = vpop.f32.mrf.mxu0
    %v216 = vadd.f32 %v76, %v215
    %v217 = vpop.f32.mrf.mxu0
    %v218 = vpop.f32.mrf.mxu0
    %v219 = vpop.f32.mrf.mxu0
    %220 = vdwg.mxu0
    %vm221 = vcmask 261120
    %v222 = vsel %vm221, %v216, 0.0
    %223 = vadd.xlane.f32.xlu0 %v222
    %v224 = vpop.xlane.xlu0 %223
    %v225 = vmul.f32 %v216, %v216
    %v226 = vsel %vm221, %v225, 0.0
    %227 = vadd.xlane.f32.xlu0 %v226
    %v228 = vpop.xlane.xlu0 %227
    %v229 = vmul.f32 %v224, 0.03125
    %v230 = vmul.f32 %v228, 0.03125
    %v231 = vmul.f32 %v229, %v229
    %v232 = vsub.f32 %v230, %v231
    %v233 = vmax.f32 %v232, 0.0
    %v234 = vsub.f32 %v216, %v229
    %v235 = vadd.f32 %v233, 1e-05
    %v236 = vrsqrt.pop %v235
    %v237 = vmul.f32 %v234, %v236
    %v239 = vlaneseq
    %v240 = vshrl.u32 %v239, 7
    %v241 = vsub.s32 0, %v240
    %v242 = vrot.slane %v35, %v241
    %v244 = vmul.f32 %v237, %v242
    %v246 = vlaneseq
    %v247 = vshrl.u32 %v246, 7
    %v248 = vsub.s32 0, %v247
    %v249 = vrot.slane %v36, %v248
    %v251 = vadd.f32 %v244, %v249
    %vm252 = vcmp.ge.f32.partialorder %v251, 0.0
    %v253 = vmul.f32 %v251, 0.01
    %v254 = vsel %vm252, %v251, %v253
    %v255 = vpack.c.bf16 %v254, %v254
    %v256 = vld [vmem:[%s5] sm:$0xf]
    %v257 = vld [vmem:[%s5 + $0x4] sm:$0xf]
    %v258 = vld [vmem:[%s5 + $0x8] sm:$0xf]
    %v259 = vld [vmem:[%s5 + $0xc] sm:$0xf]
    %v261 = vlaneseq
    %v262 = vshrl.u32 %v261, 7
    %v263 = vsub.s32 0, %v262
    %v264 = vrot.slane %v37, %v263
    %v270 = vunpack.c.l.b16 %v256
    %v271 = vunpack.c.l.b16 %v257
    %v272 = vunpack.c.l.b16 %v258
    %v273 = vunpack.c.l.b16 %v259
    %v274 = vpack.c.b16 %v271, %v270
    %v275 = vpack.c.b16 %v273, %v272
    %v279 = vsel %vm221, %v255, 0
    %281 = vmatprep.subr.bf16.mxu0 0
    %282 = vmatpush1.bf16.msra.mxu0 0
    %283 = vmatprep.subr.bf16.mxu0 0
    %284 = vmatpush1.bf16.msra.mxu0 0
    %285 = vmatprep.subr.bf16.mxu0 0
    %286 = vmatpush1.bf16.msra.mxu0 0
    %287 = vmatprep.subr.bf16.mxu0 0
    %288 = vmatpush1.bf16.msra.mxu0 0
    %289 = vmatprep.subr.bf16.mxu0 0
    %290 = vmatpush1.bf16.msra.mxu0 0
    %291 = vmatprep.subr.bf16.mxu0 0
    %292 = vmatpush1.bf16.msra.mxu0 0
    %293 = vmatprep.subr.bf16.mxu0 0
    %294 = vmatpush1.bf16.msra.mxu0 %v275
    %295 = vmatprep.subr.bf16.mxu0 0
    %296 = vmatpush1.bf16.msra.mxu0 %v274
    %297 = vmatprep.subr.bf16.mxu0 0
    %298 = vmatpush2.bf16.msra.mxu0 0
    %299 = vmatprep.subr.bf16.mxu0 0
    %300 = vmatpush2.bf16.msra.mxu0 0
    %301 = vmatprep.subr.bf16.mxu0 0
    %302 = vmatpush2.bf16.msra.mxu0 0
    %303 = vmatprep.subr.bf16.mxu0 0
    %304 = vmatpush2.bf16.msra.mxu0 0
    %305 = vmatprep.subr.bf16.mxu0 0
    %306 = vmatpush2.bf16.msra.mxu0 0
    %307 = vmatprep.subr.bf16.mxu0 0
    %308 = vmatpush2.bf16.msra.mxu0 0
    %309 = vmatprep.subr.bf16.mxu0 0
    %310 = vmatpush2.bf16.msra.mxu0 0
    %311 = vmatprep.subr.bf16.mxu0 0
    %312 = vmatpush2.bf16.msra.mxu0 0
    %313 = vmatprep.mubr.bf16.mxu0 0
    %314 = vmatmul.mubr.bf16.gmra.mxu0 %v279
    %v315 = vpop.f32.mrf.mxu0
    %v316 = vadd.f32 %v264, %v315
    %v317 = vpop.f32.mrf.mxu0
    %v318 = vpop.f32.mrf.mxu0
    %v319 = vpop.f32.mrf.mxu0
    %320 = vdwg.mxu0
    %v321 = vmax.f32 %v316, -60.0
    %v322 = vsub.f32 0.0, %v321
    %v323 = vmul.f32 %v322, 1.442695
    %v324 = vpow.pop %v323
    %v325 = vadd.f32 %v324, 1.0
    %v326 = vrcp.pop %v325
    %v327 = vpack.c.bf16 %v326, %v326
    %v328 = vld [vmem:[%s7] sm:$0xff]
    %v329 = vld [vmem:[%s7 + $0x8] sm:$0xff]
    %v330 = vld [vmem:[%s7 + $0x10] sm:$0xff]
    %v331 = vld [vmem:[%s7 + $0x18] sm:$0xff]
    %v333 = vlaneseq
    %v334 = vshrl.u32 %v333, 7
    %v335 = vsub.s32 0, %v334
    %v336 = vrot.slane %v38, %v335
    %v337 = vlaneseq
    %v338 = vshrl.u32 %v337, 7
    %v339 = vsub.s32 1, %v338
    %v340 = vrot.slane %v38, %v339
    %v347 = vunpack.c.l.b16 %v328
    %v348 = vunpack.c.h.b16 %v328
    %v349 = vunpack.c.l.b16 %v329
    %v350 = vunpack.c.h.b16 %v329
    %v351 = vunpack.c.l.b16 %v330
    %v352 = vunpack.c.h.b16 %v330
    %v353 = vunpack.c.l.b16 %v331
    %v354 = vunpack.c.h.b16 %v331
    %v355 = vpack.c.b16 %v349, %v347
    %v356 = vpack.c.b16 %v350, %v348
    %v357 = vpack.c.b16 %v353, %v351
    %v358 = vpack.c.b16 %v354, %v352
    %v364 = vsel %vm221, %v327, 0
    %366 = vmatprep.subr.bf16.mxu0 0
    %367 = vmatpush1.bf16.msra.mxu0 0
    %368 = vmatprep.subr.bf16.mxu0 0
    %369 = vmatpush1.bf16.msra.mxu0 0
    %370 = vmatprep.subr.bf16.mxu0 0
    %371 = vmatpush1.bf16.msra.mxu0 0
    %372 = vmatprep.subr.bf16.mxu0 0
    %373 = vmatpush1.bf16.msra.mxu0 0
    %374 = vmatprep.subr.bf16.mxu0 0
    %375 = vmatpush1.bf16.msra.mxu0 0
    %376 = vmatprep.subr.bf16.mxu0 0
    %377 = vmatpush1.bf16.msra.mxu0 0
    %378 = vmatprep.subr.bf16.mxu0 %v358
    %379 = vmatpush1.bf16.msra.mxu0 %v357
    %380 = vmatprep.subr.bf16.mxu0 %v356
    %381 = vmatpush1.bf16.msra.mxu0 %v355
    %382 = vmatprep.subr.bf16.mxu0 0
    %383 = vmatpush2.bf16.msra.mxu0 0
    %384 = vmatprep.subr.bf16.mxu0 0
    %385 = vmatpush2.bf16.msra.mxu0 0
    %386 = vmatprep.subr.bf16.mxu0 0
    %387 = vmatpush2.bf16.msra.mxu0 0
    %388 = vmatprep.subr.bf16.mxu0 0
    %389 = vmatpush2.bf16.msra.mxu0 0
    %390 = vmatprep.subr.bf16.mxu0 0
    %391 = vmatpush2.bf16.msra.mxu0 0
    %392 = vmatprep.subr.bf16.mxu0 0
    %393 = vmatpush2.bf16.msra.mxu0 0
    %394 = vmatprep.subr.bf16.mxu0 0
    %395 = vmatpush2.bf16.msra.mxu0 0
    %396 = vmatprep.subr.bf16.mxu0 0
    %397 = vmatpush2.bf16.msra.mxu0 0
    %398 = vmatprep.mubr.bf16.mxu0 0
    %399 = vmatmul.mubr.bf16.gmra.mxu0 %v364
    %v400 = vpop.f32.mrf.mxu0
    %v401 = vadd.f32 %v336, %v400
    %v402 = vpop.f32.mrf.mxu0
    %v403 = vadd.f32 %v340, %v402
    %v404 = vpop.f32.mrf.mxu0
    %v405 = vpop.f32.mrf.mxu0
    %406 = vdwg.mxu0
    %407 = vst [vmem:[#allocation2] sm:$0xff] %v401
    %408 = vst [vmem:[#allocation2 + $0x8] sm:$0xff] %v403
    // Predicated region
    $region38: #{tpu_custom_call.1} parent=1 // pred_check
      _
    $region39: #{tpu_custom_call.1} parent=1 // pred_check_branch
      %410 = sbr.rel (0) target = $region41
    $region40: #{tpu_custom_call.1} parent=1 // pred_region
      %s412 = ssub.s32 256, 256
      %413 = vsyncadd [#allocation3], %s412
      %s415 = sshll.u32 [#allocation2], 4
      %s416 = int_to_ptr.vmem [resolvable:$true] %s415
      %418 = dma.vmem_to_hbm [thread:$0]  %s416, 256, %s9, [#allocation3]
    $region41: #{tpu_custom_call.1} parent=1 // pred_fallthru
      _
    // Predicated region
    $region42: #{tpu_custom_call.1} parent=1 // pred_check
      _
    $region43: #{tpu_custom_call.1} parent=1 // pred_check_branch
      %420 = sbr.rel (0) target = $region45
    $region44: #{tpu_custom_call.1} parent=1 // pred_region
      %421 = dma.done [#allocation3], 256
    $region45: #{tpu_custom_call.1} parent=1 // pred_fallthru
      _
    %422 = vsyncpa [#allocation3], 1

</llo_original>
